<compile_context>
chip_gen: v6e
topology: v6e:2x2x1
jax: 0.10.0
libtpu: 0.0.40
codegen_flags: <defaults>
</compile_context>

<pallas_src>
import math

import jax
import jax.numpy as jnp
import numpy as np
from jax.experimental import pallas as pl
from jax.experimental.pallas import tpu as pltpu


def make_pos_encoding(model_dim: int, max_length: int = 512) -> jnp.ndarray:
    """Replicates the PyTorch __init__ table exactly. Shape: (1, max_length, model_dim)."""
    pe = np.zeros((max_length, model_dim), dtype=np.float32)
    for pos in range(max_length):
        for i in range(0, model_dim, 2):
            pe[pos, i] = math.sin(pos / 10000 ** (2 * i / model_dim))
            if i + 1 < model_dim:  # guard only matters for odd model_dim (PyTorch would crash)
                pe[pos, i + 1] = math.cos(pos / 10000 ** (2 * (i + 1) / model_dim))
    return jnp.asarray(pe)[None, :, :]  # (1, max_length, model_dim)


def _pos_enc_add_kernel(x_ref, pe_ref, o_ref):
    # x_ref: (TB, R, C) or (1, TR, C); pe_ref: (1, R, C) or (1, TR, C).
    # Leading-dim broadcast handles the batch-folded case; plain add otherwise.
    o_ref[...] = x_ref[...] + pe_ref[...]


def _vmem_budget():
    """(default target tile bytes, vmem_limit cap) tuned per TPU generation."""
    try:
        vmem_cap = pltpu.get_tpu_info().vmem_capacity_bytes
    except Exception:
        vmem_cap = 64 * 1024 * 1024
    if vmem_cap <= 64 * 1024 * 1024:
        # v7x-class: 64 MiB VMEM / TC, ~3.2 TB/s HBM -> bigger tiles, tight cap.
        return 8 * 1024 * 1024, 56 * 1024 * 1024
    # v5e / v6e: 128 MiB VMEM; 4 MiB-class tiles already hit ~85-93% of HBM roofline.
    return 4 * 1024 * 1024, 100 * 1024 * 1024


def _lane_width(N: int, D: int) -> int:
    """Largest multiple of 128 (<= 8192) dividing N; falls back to full last dim D."""
    if N % 128 != 0:
        # D < 128 and non-128-divisible slab: full-last-dim blocks are still correct,
        # but stores are masked partial vst's.  Accepted (rare) performance cliff.
        return D
    cap = min(N, 8192)
    best = 128
    c = 256
    while c <= cap:
        if N % c == 0:
            best = c
        c += 128
    return best


def _largest_divisor_leq(n: int, target: int, quantum: int = 1) -> int:
    """Largest divisor of n that is <= target and a multiple of quantum (0 if none)."""
    target = min(target, n)
    best = 0
    d = quantum
    while d <= target:
        if n % d == 0:
            best = d
        d += quantum
    return best


def _pick_row_tile(R: int, rows_target: int, sub: int):
    """Row-tile TR (divisor of R where possible, sublane-rounded) and tile count."""
    if rows_target >= R:
        return R, 1
    for q in (sub, 8):  # prefer dtype-native sublane multiples, then plain 8
        best = _largest_divisor_leq(R, rows_target, q)
        if best:
            return best, R // best
    # No suitable divisor: multiple-of-8 tile with a masked tail (last resort).
    tr = max(8, (rows_target // 8) * 8)
    return tr, pl.cdiv(R, tr)


def position_encoding_forward(
    x: jnp.ndarray,
    pos_encoding: jnp.ndarray,
    *,
    target_tile_bytes: int | None = None,
    donate_x: bool = False,
) -> jnp.ndarray:
    """x: (B, S, D); pos_encoding: (1, max_length, D). Returns x + pe[:, :S] (x.dtype)."""
    B, S, D = x.shape
    max_length = pos_encoding.shape[1]
    assert S <= max_length, f"sequence length {S} exceeds max_length {max_length}"
    assert pos_encoding.shape[2] == D, "model_dim mismatch between x and pos_encoding"

    default_tile, vmem_cap = _vmem_budget()
    tile_bytes = default_tile if target_tile_bytes is None else int(target_tile_bytes)

    # Glue: slice to S and match activation dtype (bf16 x -> bf16 PE traffic).
    pe = pos_encoding[0, :S, :].astype(x.dtype)
    itemsize = jnp.dtype(x.dtype).itemsize
    N = S * D
    sub = max(8, 32 // itemsize)  # dtype-native sublanes: f32->8, bf16->16, int8->32

    C = _lane_width(N, D)
    R = N // C
    slab_bytes = R * C * itemsize

    # Free (contiguous) reshapes into the lane-dense view.
    x2 = x.reshape(B, R, C)
    pe2 = pe.reshape(1, R, C)

    alias = {0: 0} if donate_x else {}

    if slab_bytes <= tile_bytes:
        # --- Batch-folded path (common case): whole (S, D) slab per block, TB batches
        # per grid step, PE block index constant so its tile is fetched once.
        tb_target = max(1, tile_bytes // slab_bytes)
        TB = _largest_divisor_leq(B, tb_target) or 1
        grid = (B // TB,)
        x_blk_bytes = TB * slab_bytes
        footprint = 2 * (2 * x_blk_bytes + slab_bytes)  # double-buffered x, out, pe
        in_specs = [
            pl.BlockSpec((TB, R, C), lambda t: (t, 0, 0)),   # x: TB batches per step
            pl.BlockSpec((1, R, C), lambda t: (0, 0, 0)),    # PE: constant block index
        ]
        out_specs = pl.BlockSpec((TB, R, C), lambda t: (t, 0, 0))
        semantics = ("parallel",)
    else:
        # --- Row-tiled path (large slabs): batch innermost so the PE block index only
        # changes once per row-tile and its DMA is reused across all B batch steps.
        rows_target = max(1, tile_bytes // (C * itemsize))
        TR, num_r_tiles = _pick_row_tile(R, rows_target, sub)
        grid = (num_r_tiles, B)
        footprint = 6 * TR * C * itemsize  # double-buffered x, out, pe tiles
        in_specs = [
            pl.BlockSpec((1, TR, C), lambda r, b: (b, r, 0)),  # x tile
            pl.BlockSpec((1, TR, C), lambda r, b: (0, r, 0)),  # shared PE tile
        ]
        out_specs = pl.BlockSpec((1, TR, C), lambda r, b: (b, r, 0))
        semantics = ("parallel", "parallel")

    # Scoped-VMEM limit from the actual footprint (+25% / +1 MiB slack), clamped per
    # generation; never below the 16 MiB v5e default.
    vmem_limit = min(vmem_cap, max(16 * 1024 * 1024, int(footprint * 1.25) + (1 << 20)))

    out2 = pl.pallas_call(
        _pos_enc_add_kernel,
        out_shape=jax.ShapeDtypeStruct((B, R, C), x.dtype),
        grid=grid,
        in_specs=in_specs,
        out_specs=out_specs,
        input_output_aliases=alias,
        compiler_params=pltpu.CompilerParams(
            dimension_semantics=semantics,
            vmem_limit_bytes=vmem_limit,
        ),
    )(x2, pe2)
    return out2.reshape(B, S, D)


if __name__ == "__main__":
    # --- Primary check: small shapes from the module spec (batch-folded path). ---
    B, S, D = 2, 8, 32
    MAX_LEN = 512

    key = jax.random.PRNGKey(0)
    x = jax.random.normal(key, (B, S, D), dtype=jnp.float32)
    pos_encoding = make_pos_encoding(D, MAX_LEN)

    fwd = jax.jit(
        position_encoding_forward, static_argnames=("target_tile_bytes", "donate_x")
    )
    out = jax.block_until_ready(fwd(x, pos_encoding))

    ref = x + pos_encoding[:, :S, :].astype(x.dtype)
    assert out.shape == (B, S, D)
    assert jnp.allclose(out, ref, atol=1e-6), "mismatch vs reference (folded path)"

    # --- Secondary check: force the row-tiled path with a tiny tile target. ---
    B2, S2, D2 = 2, 256, 512
    pos_encoding2 = make_pos_encoding(D2, MAX_LEN)
    x_big = jax.random.normal(jax.random.PRNGKey(1), (B2, S2, D2), dtype=jnp.float32)
    out_big = jax.block_until_ready(
        fwd(x_big, pos_encoding2, target_tile_bytes=128 * 1024)
    )
    ref_big = x_big + pos_encoding2[:, :S2, :].astype(x_big.dtype)
    assert jnp.allclose(out_big, ref_big, atol=1e-6), "mismatch vs reference (tiled path)"

    print("KERNEL_OK")
</pallas_src>

<mosaic_0001>
module attributes {stable_mosaic.version = 11 : i64} {
  func.func @_pos_enc_add_kernel(%arg0: i32, %arg1: memref<2x1x256xf32, #tpu.memory_space<vmem>>, %arg2: memref<1x1x256xf32, #tpu.memory_space<vmem>>, %arg3: memref<2x1x256xf32, #tpu.memory_space<vmem>>) attributes {dimension_semantics = [#tpu.dimension_semantics<parallel>], iteration_bounds = array<i64: 1>, scalar_prefetch = 0 : i64, scratch_operands = 0 : i64, tpu.core_type = #tpu.core_type<tc>, window_params = [{transform_indices = @transform_0, window_bounds = array<i64: 2, 1, 256>}, {pipeline_mode = #tpu.pipeline_mode<synchronous>, transform_indices = @transform_1, window_bounds = array<i64: 1, 1, 256>}, {transform_indices = @transform_2, window_bounds = array<i64: 2, 1, 256>}]} {
    %c0 = arith.constant 0 : index
    %c0_0 = arith.constant 0 : index
    %c0_1 = arith.constant 0 : index
    %0 = vector.load %arg1[%c0, %c0_0, %c0_1] : memref<2x1x256xf32, #tpu.memory_space<vmem>>, vector<2x1x256xf32>
    %c0_2 = arith.constant 0 : index
    %c0_3 = arith.constant 0 : index
    %c0_4 = arith.constant 0 : index
    %1 = vector.load %arg2[%c0_2, %c0_3, %c0_4] : memref<1x1x256xf32, #tpu.memory_space<vmem>>, vector<1x1x256xf32>
    %2 = vector.broadcast %1 : vector<1x1x256xf32> to vector<2x1x256xf32>
    %3 = arith.addf %0, %2 : vector<2x1x256xf32>
    %c0_5 = arith.constant 0 : index
    %c0_6 = arith.constant 0 : index
    %c0_7 = arith.constant 0 : index
    %4 = vector.load %arg3[%c0_5, %c0_6, %c0_7] : memref<2x1x256xf32, #tpu.memory_space<vmem>>, vector<2x1x256xf32>
    tpu.vector_store %arg3[%c0_5, %c0_6, %c0_7], %3 {strides = array<i32>} : memref<2x1x256xf32, #tpu.memory_space<vmem>>, vector<2x1x256xf32>,
    return
  }
  func.func @transform_0(%arg0: i32) -> (i32, i32, i32) {
    %c0_i32 = arith.constant 0 : i32
    %c0_i32_0 = arith.constant 0 : i32
    %c0_i32_1 = arith.constant 0 : i32
    return %arg0, %c0_i32, %c0_i32_0 : i32, i32, i32
  }
  func.func @transform_1(%arg0: i32) -> (i32, i32, i32) {
    %c0_i32 = arith.constant 0 : i32
    %c0_i32_0 = arith.constant 0 : i32
    %c0_i32_1 = arith.constant 0 : i32
    %c0_i32_2 = arith.constant 0 : i32
    return %c0_i32, %c0_i32_0, %c0_i32_1 : i32, i32, i32
  }
  func.func @transform_2(%arg0: i32) -> (i32, i32, i32) {
    %c0_i32 = arith.constant 0 : i32
    %c0_i32_0 = arith.constant 0 : i32
    %c0_i32_1 = arith.constant 0 : i32
    return %arg0, %c0_i32, %c0_i32_0 : i32, i32, i32
  }
}

</mosaic_0001>

<llo_original>
// kernel: squeeze.1
$region0: #{squeeze.1}
  %s0 = inlined_call_operand.vmem [shape: f32[1,8,32], index: 0, kind: input, shape index: {}]
  %s1 = inlined_call_operand.vmem [shape: f32[1,1,256], index: 1, kind: output, shape index: {}]
  $region1: #{squeeze.1} parent=0
    #allocation0 [shape = 'u8[8192]{0}', space=vmem, size = 0x2000, scoped, tag = 'scoped mem for output reshape']
    %s2 = smov 3
    %v3 = vld [vmem:[%s0] ss:$4 sm:%s2]
    %vm4 = vcmask 261120
    %5 = vst.msk [vmem:[#allocation0] ss:$8 sm:$0x3] %vm4, %v3
    %s6 = scalar_lea.vmem %s0, 3
    %s7 = smov 3
    %v8 = vld [vmem:[%s6] ss:$4 sm:%s7]
    %9 = vrot.lane.b32.xlu0 %v8, 96
    %v10 = vpop.permute.xlu0 %9
    %vm11 = vcmask 1048320
    %12 = vst.msk [vmem:[#allocation0] ss:$8 sm:$0x3] %vm11, %v10
    %s13 = scalar_lea.vmem %s0, 2
    %s14 = smov 3
    %v15 = vld [vmem:[%s13] ss:$4 sm:%s14]
    %16 = vrot.lane.b32.xlu0 %v15, 64
    %v17 = vpop.permute.xlu0 %16
    %vm18 = vcmask 785920
    %19 = vst.msk [vmem:[#allocation0] ss:$8 sm:$0x3] %vm18, %v17
    %s20 = scalar_lea.vmem %s0, 1
    %s21 = smov 3
    %v22 = vld [vmem:[%s20] ss:$4 sm:%s21]
    %23 = vrot.lane.b32.xlu0 %v22, 32
    %v24 = vpop.permute.xlu0 %23
    %vm25 = vcmask 523520
    %26 = vst.msk [vmem:[#allocation0] ss:$8 sm:$0x3] %vm25, %v24
    %s28 = sshll.u32 1, 1
    %s29 = ssub.s32 %s28, 1
    %v31 = vld [vmem:[#allocation0] sm:%s29]
    %s32 = sshll.u32 1, 1
    %s33 = ssub.s32 %s32, 1
    %34 = vst [vmem:[%s1] sm:%s33] %v31
    %s35 = scalar_lea.vmem [#allocation0], 8
    %v36 = vld [vmem:[%s35] sm:%s29]
    %s37 = sshll.u32 1, 1
    %s38 = ssub.s32 %s37, 1
    %s39 = scalar_lea.vmem %s1, 1
    %40 = vst [vmem:[%s39] sm:%s38] %v36

// kernel: position_encoding_forward.1
$region0: #{position_encoding_forward.1}
  #allocation0 [shape = 'u32[]', space=smem, size = 0x4, offset = 0x4, fixed_abs, tag = 'smem constant byte address 0x4 - core index']
  #allocation1 [shape = 'u32[144,128]{1,0:T(1,128)}', space=vmem, size = 0x12000, scoped, tag = 'internal scratch']
  %s0 = inlined_call_operand.vmem [shape: f32[2,1,256], index: 0, kind: input, shape index: {}]
  %s1 = inlined_call_operand.vmem [shape: f32[1,1,256], index: 1, kind: input, shape index: {}]
  %s2 = inlined_call_operand.vmem [shape: f32[2,1,256], index: 2, kind: output, shape index: {}]
  %s3 = sld [smem:[#allocation0]]
  $region18: #{position_encoding_forward.1} parent=0
    _
  %s5 = ssub.s32 1, %s3
  %s6 = scalar_select 0, %s5, %s3
  // Predicated region
  $region2: #{position_encoding_forward.1} parent=0 // pred_check
    _
  $region3: #{position_encoding_forward.1} parent=0 // pred_check_branch
    %8 = sbr.rel (0) target = $region5
  $region4: #{position_encoding_forward.1} parent=0 // pred_region
    _
  $region5: #{position_encoding_forward.1} parent=0 // pred_fallthru
    _
  // Predicated region
  $region6: #{position_encoding_forward.1} parent=0 // pred_check
    _
  $region7: #{position_encoding_forward.1} parent=0 // pred_check_branch
    %10 = sbr.rel (0) target = $region9
  $region8: #{position_encoding_forward.1} parent=0 // pred_region
    _
  $region9: #{position_encoding_forward.1} parent=0 // pred_fallthru
    _
  %v11 = vld [vmem:[%s0] sm:$0x3]
  %v12 = vld [vmem:[%s0 + $0x2] sm:$0x3]
  %v13 = vld [vmem:[%s1] sm:$0x3]
  %v14 = vadd.f32 %v11, %v13
  %v15 = vadd.f32 %v12, %v13
  %v16 = vlaneseq
  %vm17 = vcmp.ge.s32.totalorder %v16, 0
  %vm18 = vcmp.lt.s32.totalorder %v16, 256
  %vm19 = vmand %vm17, %vm18
  %20 = vst.msk [vmem:[%s2] sm:$0x3] %vm19, %v14
  %21 = vst.msk [vmem:[%s2 + $0x2] sm:$0x3] %vm19, %v15
  // Predicated region
  $region10: #{position_encoding_forward.1} parent=0 // pred_check
    _
  $region11: #{position_encoding_forward.1} parent=0 // pred_check_branch
    %23 = sbr.rel (0) target = $region13
  $region12: #{position_encoding_forward.1} parent=0 // pred_region
    _
  $region13: #{position_encoding_forward.1} parent=0 // pred_fallthru
    _
  // Predicated region
  $region14: #{position_encoding_forward.1} parent=0 // pred_check
    _
  $region15: #{position_encoding_forward.1} parent=0 // pred_check_branch
    %25 = sbr.rel (0) target = $region17
  $region16: #{position_encoding_forward.1} parent=0 // pred_region
    _
  $region17: #{position_encoding_forward.1} parent=0 // pred_fallthru
    _

</llo_original>
